<compile_context>
chip_gen: v7x
topology: tpu7x:2x2x1
jax: 0.10.0
libtpu: 0.0.40
codegen_flags: <defaults>
</compile_context>

<pallas_src>
import functools

import jax
import jax.numpy as jnp
import numpy as np
from jax.experimental import pallas as pl
from jax.experimental.pallas import tpu as pltpu


_LANE = 128


def _target_block_bytes():
    """Per-generation x-block byte target.

    ~1 MiB reaches ~85% of HBM roofline on v5e/v6e; v7x's ~3.2 TB/s HBM makes
    1 MiB per-step-overhead heavy, so use 2 MiB there (still tiny vs its
    64 MiB VMEM when double-buffered for x + out).
    """
    try:
        kind = jax.devices()[0].device_kind.lower()
    except Exception:
        kind = ""
    if "v7" in kind:
        return 2 << 20
    return 1 << 20


def _round_down(x, unit):
    return max(unit, (x // unit) * unit)


def _pick_tile(dim, unit, cap):
    """Tile along one axis.

    Returns the full dim when it fits under the cap (a full-dim block is always
    a legal block shape, aligned or not); otherwise returns the largest
    unit-aligned tile <= cap and relies on a cdiv grid + masked ragged last
    block.  Never exceeds the byte budget, unlike the old full-dim fallback.
    """
    cap = _round_down(cap, unit)
    return dim if dim <= cap else cap


def _wscale_kernel(x_ref, b_ref, o_ref, *, scale):
    # x_ref: (TR, TL); b_ref: (TR, 1) or (1, TL); o_ref: (TR, TL)
    # One VPU fma per vreg; the bias broadcast across lanes/sublanes is free.
    o_ref[...] = x_ref[...] * scale + b_ref[...]


def wscale_layer(x, bias, scale, lr_multiplier=1.0):
    """out = x * scale + bias * lr_multiplier, broadcast over the channel dim.

    x: (B, C, H, W) or (B, C); bias: (C,). `scale` is a Python/compile-time
    constant, matching the PyTorch module.

    NOTE: the bias is cast to x.dtype before the add.  PyTorch keeps an fp32
    bias parameter and type-promotes the add (so a bf16 input yields an fp32
    output there); this kernel keeps the output in x.dtype - the numerical
    difference is negligible for this layer.
    """
    if x.ndim == 4:
        B, C, H, W = x.shape
        assert bias.shape == (C,)
        hw = H * W
        bias_eff = (bias * lr_multiplier).astype(x.dtype)
        if hw >= _LANE and hw % _LANE == 0:
            # H*W already lane-dense: one bias value per fused (batch, chan) row.
            R, L = B * C, hw
            x2 = x.reshape(R, L)
            b2 = jnp.broadcast_to(bias_eff[None, :], (B, C)).reshape(R, 1)
            bias_per_row = True
        else:
            # Small / unaligned feature maps (StyleGAN early layers: H*W=16, 64):
            # fuse C into the lane axis -> full-width unmasked stores, and the
            # bias becomes a resident (1, tl) row.
            R, L = B, C * hw
            x2 = x.reshape(R, L)
            b2 = jnp.repeat(bias_eff, hw)[None, :]
            bias_per_row = False
    elif x.ndim == 2:
        B, C = x.shape
        assert bias.shape == (C,)
        R, L = B, C
        x2 = x
        b2 = (bias * lr_multiplier).astype(x.dtype)[None, :]
        bias_per_row = False
    else:
        raise ValueError(
            "Input must be [batch, channel, height, width] or [batch, channel], "
            f"got shape {x.shape}")

    itemsize = x.dtype.itemsize
    # Dtype-aware sublane unit: 8 for f32, 16 for bf16, 32 for int8/fp8.
    sub_unit = max(8, 32 // itemsize)
    target = _target_block_bytes()

    # Lanes first (cap derived from the byte budget, not hard-coded), then rows.
    tl = _pick_tile(L, _LANE, target // (sub_unit * itemsize))
    tr = _pick_tile(R, sub_unit, max(sub_unit, target // (max(tl, 1) * itemsize)))
    grid = (pl.cdiv(R, tr), pl.cdiv(L, tl))

    # Megacore safety net (v7x has 2 TensorCores fed via 'parallel' grid axes):
    # the byte-targeted tiles above already guarantee >=2 blocks whenever the
    # tensor exceeds ~2x the block target, but keep an explicit guard.
    if grid[0] * grid[1] == 1 and R * L * itemsize > (4 << 20):
        if tr >= 2 * sub_unit:
            tr = _round_down(tr // 2, sub_unit)
        elif tl >= 2 * _LANE:
            tl = _round_down(tl // 2, _LANE)
        grid = (pl.cdiv(R, tr), pl.cdiv(L, tl))

    if bias_per_row:
        # Constant across the inner (lane) grid axis -> effectively resident.
        b_spec = pl.BlockSpec((tr, 1), lambda r, l: (r, 0))
    else:
        b_spec = pl.BlockSpec((1, tl), lambda r, l: (0, l))

    out2 = pl.pallas_call(
        functools.partial(_wscale_kernel, scale=float(scale)),
        out_shape=jax.ShapeDtypeStruct((R, L), x.dtype),
        grid=grid,
        in_specs=[
            pl.BlockSpec((tr, tl), lambda r, l: (r, l)),   # x
            b_spec,                                        # bias vector
        ],
        out_specs=pl.BlockSpec((tr, tl), lambda r, l: (r, l)),
        compiler_params=pltpu.CompilerParams(
            dimension_semantics=("parallel", "parallel"),
            # Explicit headroom: 2x(2 MiB) x-blocks + 2x(2 MiB) out-blocks + bias
            # is ~8-10 MiB; 32 MiB is safe on v5e (128 MiB), v6e (128 MiB) and
            # v7x (64 MiB physical / 32 MiB scoped default).
            vmem_limit_bytes=32 * 1024 * 1024,
        ),
    )(x2, b2)

    return out2.reshape(x.shape)


if __name__ == "__main__":
    key = jax.random.PRNGKey(0)
    kx, kb, kx2, kb2, kx3, kb3 = jax.random.split(key, 6)

    # Module hyper-parameters (scale is a constant, exactly as in the module).
    in_channels, out_channels, kernel_size = 8, 4, 3
    gain, lr_multiplier = float(np.sqrt(2.0)), 2.0
    fan_in = in_channels * kernel_size * kernel_size
    scale = gain / np.sqrt(fan_in) * lr_multiplier

    # ---- 4-D path, lane-aligned spatial: (B, C, H, W) with H*W % 128 == 0 ----
    B, C, H, W = 2, out_channels, 16, 16
    x = jax.random.normal(kx, (B, C, H, W), dtype=jnp.float32)
    # Module initializes bias to zeros; use nonzero values so the per-channel
    # broadcast-add path is actually exercised.
    bias = jax.random.normal(kb, (C,), dtype=jnp.float32)
    out = jax.block_until_ready(wscale_layer(x, bias, scale, lr_multiplier))
    ref = x * scale + bias.reshape(1, -1, 1, 1) * lr_multiplier
    assert out.shape == x.shape
    assert jnp.allclose(out, ref, atol=1e-6, rtol=1e-6)

    # ---- 4-D path, small spatial (StyleGAN early layer): H*W = 16 < 128 ----
    xs = jax.random.normal(kx3, (2, out_channels, 4, 4), dtype=jnp.float32)
    biass = jax.random.normal(kb3, (out_channels,), dtype=jnp.float32)
    outs = jax.block_until_ready(wscale_layer(xs, biass, scale, lr_multiplier))
    refs = xs * scale + biass.reshape(1, -1, 1, 1) * lr_multiplier
    assert jnp.allclose(outs, refs, atol=1e-6, rtol=1e-6)

    # ---- 4-D path, bf16 (exercises the dtype-aware row-tile unit) ----
    xb = x.astype(jnp.bfloat16)
    outb = jax.block_until_ready(wscale_layer(xb, bias, scale, lr_multiplier))
    refb = xb * float(scale) + (bias * lr_multiplier).astype(jnp.bfloat16).reshape(1, -1, 1, 1)
    assert jnp.allclose(outb.astype(jnp.float32), refb.astype(jnp.float32),
                        atol=1e-2, rtol=1e-2)

    # ---- 2-D path: (B, C) as produced by an upstream nn.Linear ----
    C2 = 128
    x2d = jax.random.normal(kx2, (2, C2), dtype=jnp.float32)
    bias2d = jax.random.normal(kb2, (C2,), dtype=jnp.float32)
    out2d = jax.block_until_ready(wscale_layer(x2d, bias2d, scale, lr_multiplier))
    ref2d = x2d * scale + bias2d.reshape(1, -1) * lr_multiplier
    assert jnp.allclose(out2d, ref2d, atol=1e-6, rtol=1e-6)

    print("KERNEL_OK")
</pallas_src>

<mosaic_0001>
module attributes {stable_mosaic.version = 11 : i64} {
  func.func @_wscale_kernel(%arg0: i32, %arg1: i32, %arg2: memref<8x256xf32, #tpu.memory_space<vmem>>, %arg3: memref<8x1xf32, #tpu.memory_space<vmem>>, %arg4: memref<8x256xf32, #tpu.memory_space<vmem>>) attributes {dimension_semantics = [#tpu.dimension_semantics<parallel>, #tpu.dimension_semantics<parallel>], iteration_bounds = array<i64: 1, 1>, scalar_prefetch = 0 : i64, scratch_operands = 0 : i64, tpu.core_type = #tpu.core_type<tc>, window_params = [{transform_indices = @transform_0, window_bounds = array<i64: 8, 256>}, {transform_indices = @transform_1, window_bounds = array<i64: 8, 1>}, {transform_indices = @transform_2, window_bounds = array<i64: 8, 256>}]} {
    %c0 = arith.constant 0 : index
    %c0_0 = arith.constant 0 : index
    %0 = vector.load %arg2[%c0, %c0_0] : memref<8x256xf32, #tpu.memory_space<vmem>>, vector<8x256xf32>
    %cst = arith.constant 0.333333343 : f32
    %1 = vector.broadcast %cst : f32 to vector<8x256xf32>
    %2 = arith.mulf %0, %1 : vector<8x256xf32>
    %c0_1 = arith.constant 0 : index
    %c0_2 = arith.constant 0 : index
    %3 = vector.load %arg3[%c0_1, %c0_2] : memref<8x1xf32, #tpu.memory_space<vmem>>, vector<8x1xf32>
    %4 = vector.broadcast %3 : vector<8x1xf32> to vector<8x256xf32>
    %5 = arith.addf %2, %4 : vector<8x256xf32>
    %c0_3 = arith.constant 0 : index
    %c0_4 = arith.constant 0 : index
    %6 = vector.load %arg4[%c0_3, %c0_4] : memref<8x256xf32, #tpu.memory_space<vmem>>, vector<8x256xf32>
    tpu.vector_store %arg4[%c0_3, %c0_4], %5 {strides = array<i32>} : memref<8x256xf32, #tpu.memory_space<vmem>>, vector<8x256xf32>,
    return
  }
  func.func @transform_0(%arg0: i32, %arg1: i32) -> (i32, i32) {
    %c0_i32 = arith.constant 0 : i32
    return %arg0, %arg1 : i32, i32
  }
  func.func @transform_1(%arg0: i32, %arg1: i32) -> (i32, i32) {
    %c0_i32 = arith.constant 0 : i32
    %c0_i32_0 = arith.constant 0 : i32
    return %arg0, %c0_i32 : i32, i32
  }
  func.func @transform_2(%arg0: i32, %arg1: i32) -> (i32, i32) {
    %c0_i32 = arith.constant 0 : i32
    return %arg0, %arg1 : i32, i32
  }
}

</mosaic_0001>

<llo_original>
// kernel: tpu_custom_call.1
$region0: #{tpu_custom_call.1}
  #allocation0 [shape = 'u32[]', space=smem, size = 0x4, offset = 0x4, fixed_abs, tag = 'smem constant byte address 0x4 - core index']
  #allocation1 [shape = 'u32[144,128]{1,0:T(1,128)}', space=vmem, size = 0x12000, scoped, tag = 'internal scratch']
  %s0 = inlined_call_operand.hbm [shape: f32[8,256], index: 0, kind: input, shape index: {}]
  %s1 = inlined_call_operand.vmem [shape: f32[8,1], index: 1, kind: input, shape index: {}]
  %s2 = inlined_call_operand.hbm [shape: f32[8,256], index: 2, kind: output, shape index: {}]
  %s3 = sld [smem:[#allocation0]]
  $region22: #{tpu_custom_call.1} parent=0
    _
  %s5 = ssub.s32 1, %s3
  %s6 = scalar_select 0, %s5, %s3
  $region1: #{tpu_custom_call.1} parent=0
    #allocation2 [shape = 'u8[8192]{0}', space=vmem, size = 0x2000, scoped, tag = 'input window, operand 0, single buffered']
    #allocation3 [shape = 's32[1]{0}', space=sflag, size = 0x4, scoped, tag = 'scoped memory for tpu_custom_call.1']
    #allocation4 [shape = 's32[1]{0}', space=sflag, size = 0x4, scoped, tag = 'scoped memory for tpu_custom_call.1']
    #allocation5 [shape = 'u8[8192]{0}', space=vmem, size = 0x2000, scoped, tag = 'output window, operand 0, single buffered']
    %7 = vsyncpa [#allocation3], 0
    %8 = vsyncpa [#allocation4], 0
    // Predicated region
    $region2: #{tpu_custom_call.1} parent=1 // pred_check
      _
    $region3: #{tpu_custom_call.1} parent=1 // pred_check_branch
      %10 = sbr.rel (0) target = $region5
    $region4: #{tpu_custom_call.1} parent=1 // pred_region
      %s12 = ssub.s32 256, 256
      %13 = vsyncadd [#allocation3], %s12
      %s15 = sshll.u32 [#allocation2], 4
      %s16 = int_to_ptr.vmem [resolvable:$true] %s15
      %18 = dma.hbm_to_vmem [thread:$0]  %s0, 256, %s16, [#allocation3]
    $region5: #{tpu_custom_call.1} parent=1 // pred_fallthru
      _
    // Predicated region
    $region6: #{tpu_custom_call.1} parent=1 // pred_check
      _
    $region7: #{tpu_custom_call.1} parent=1 // pred_check_branch
      %20 = sbr.rel (0) target = $region9
    $region8: #{tpu_custom_call.1} parent=1 // pred_region
      _
    $region9: #{tpu_custom_call.1} parent=1 // pred_fallthru
      _
    // Predicated region
    $region10: #{tpu_custom_call.1} parent=1 // pred_check
      _
    $region11: #{tpu_custom_call.1} parent=1 // pred_check_branch
      %22 = sbr.rel (0) target = $region13
    $region12: #{tpu_custom_call.1} parent=1 // pred_region
      %23 = dma.done [#allocation3], 256
    $region13: #{tpu_custom_call.1} parent=1 // pred_fallthru
      _
    %v24 = vld [vmem:[#allocation2] sm:$0xff]
    %v25 = vld [vmem:[#allocation2 + $0x8] sm:$0xff]
    %v26 = vmul.f32 %v24, 0.33333334
    %v27 = vmul.f32 %v25, 0.33333334
    %v28 = vld [vmem:[%s1] sm:$0xff]
    %30 = vset.pattern.permute.xlu0 0
    %31 = vperm.xlu0 %30, %v28
    %v32 = vpop.permute.xlu0 %31
    %v34 = vadd.f32 %v26, %v32
    %v35 = vadd.f32 %v27, %v32
    %36 = vst [vmem:[#allocation5] sm:$0xff] %v34
    %37 = vst [vmem:[#allocation5 + $0x8] sm:$0xff] %v35
    // Predicated region
    $region14: #{tpu_custom_call.1} parent=1 // pred_check
      _
    $region15: #{tpu_custom_call.1} parent=1 // pred_check_branch
      %39 = sbr.rel (0) target = $region17
    $region16: #{tpu_custom_call.1} parent=1 // pred_region
      %s41 = ssub.s32 256, 256
      %42 = vsyncadd [#allocation4], %s41
      %s44 = sshll.u32 [#allocation5], 4
      %s45 = int_to_ptr.vmem [resolvable:$true] %s44
      %47 = dma.vmem_to_hbm [thread:$0]  %s45, 256, %s2, [#allocation4]
    $region17: #{tpu_custom_call.1} parent=1 // pred_fallthru
      _
    // Predicated region
    $region18: #{tpu_custom_call.1} parent=1 // pred_check
      _
    $region19: #{tpu_custom_call.1} parent=1 // pred_check_branch
      %49 = sbr.rel (0) target = $region21
    $region20: #{tpu_custom_call.1} parent=1 // pred_region
      %50 = dma.done [#allocation4], 256
    $region21: #{tpu_custom_call.1} parent=1 // pred_fallthru
      _
    %51 = vsyncpa [#allocation3], 1
    %52 = vsyncpa [#allocation4], 1

</llo_original>
